<compile_context>
chip_gen: v7x
topology: tpu7x:2x2x1
jax: 0.10.0
libtpu: 0.0.40
codegen_flags: <defaults>
</compile_context>

<pallas_src>
import functools

import jax
import jax.numpy as jnp
from jax.experimental import pallas as pl
from jax.experimental.pallas import tpu as pltpu


def _attention_kernel(x_ref, wt_ref, b_ref, ctx_ref, scores_ref, xbf_ref,
                      *, tb, seq, tn, h):
    # x_ref:      (tb, S, H)   f32 rows for tb batch elements (resident across j)
    # wt_ref:     (H, tn)      transposed Linear weight tile, bf16
    # b_ref:      (1, tn)      Linear bias tile, f32
    # ctx_ref:    (tb, 1, tn)  context output tile
    # scores_ref: (tb, S, tn)  softmaxed attention scores tile
    # xbf_ref:    (tb, S, H)   bf16 scratch copy of x (cast once per batch block)
    j = pl.program_id(1)

    # Cast the resident x block to bf16 once per batch block; reused for every
    # output-feature tile of the j sweep.
    @pl.when(j == 0)
    def _():
        xbf_ref[...] = x_ref[...].astype(jnp.bfloat16)

    # Linear: scores = x @ W^T + b  (bf16 MXU inputs, f32 accumulation).
    scores = jnp.dot(xbf_ref[...].reshape(tb * seq, h), wt_ref[...],
                     preferred_element_type=jnp.float32)        # (tb*S, tn)
    scores = scores.reshape(tb, seq, tn) + b_ref[...]           # (tb, S, tn)

    # Softmax over the sequence axis (== torch.nn.Softmax(dim=1)), independent
    # per batch element and per output-feature column (so N-tiling is exact).
    m = jnp.max(scores, axis=1, keepdims=True)                  # (tb, 1, tn)
    e = jnp.exp(scores - m)
    denom = jnp.sum(e, axis=1, keepdims=True)                   # (tb, 1, tn)
    p = e * (1.0 / denom)              # exact reciprocal: only tb*tn elements

    # Feature-tile slice of the already-resident f32 x block (no second HBM
    # stream for x).  When tn < H, tn is a 128-multiple by construction.
    if tn == h:
        xn = x_ref[...]
    else:
        off = pl.multiple_of(j * tn, 128)
        xn = x_ref[:, :, pl.ds(off, tn)]                        # (tb, S, tn)

    # context = sum over seq of (attn_scores * lstm_output), this feature tile.
    ctx_ref[...] = jnp.sum(p * xn, axis=1, keepdims=True)       # (tb, 1, tn)
    scores_ref[...] = p


def _vmem_config():
    """Generation-aware VMEM budget (for tile picking) and compiler limit."""
    cap = 64 * 1024 * 1024          # conservative default (v7x per-TC VMEM)
    try:
        info = pltpu.get_tpu_info()
        cap = int(getattr(info, "vmem_capacity_bytes", cap))
    except Exception:
        pass
    limit = int(cap * 0.875)        # ~56 MiB on v7x, ~112 MiB on v5e/v6e
    budget = int(cap * 0.65)        # headroom for compiler temporaries / spills
    return budget, limit


def _choose_tiles(B, S, H, vmem_budget_bytes):
    """Pick (tb, tn) so blocks + temporaries fit the VMEM budget."""
    # Output-feature tile: full H when small, else a lane-dense 128-multiple
    # divisor of H (softmax is per column, so N-tiling is exact).
    tn = H
    if H > 512:
        for cand in (512, 384, 256, 128):
            if H % cand == 0:
                tn = cand
                break
        # NOTE: if H > 512 has no 128-multiple divisor, tn stays H and the
        # budget check below simply forces tb down to compensate.

    def vmem_need(tb):
        rows = tb * S
        return (2 * rows * H * 4        # x block (f32), double buffered
                + 2 * H * tn * 2        # weight tile (bf16), double buffered
                + 2 * tn * 4            # bias tile
                + 2 * rows * tn * 4     # scores out block, double buffered
                + 2 * tb * tn * 4       # context out block, double buffered
                + rows * H * 2          # bf16 x scratch (single buffered)
                + 5 * rows * tn * 4)    # softmax / compiler temporaries headroom

    # Largest tb dividing B that fits the budget.  When B >= 2, keep at least
    # 2 steps on the (parallel) batch axis so both v7x TensorCores get work.
    max_tb = B if B < 2 else max(1, B // 2)
    best_tb = 1
    for tb in range(1, max_tb + 1):
        if B % tb:
            continue
        if vmem_need(tb) > vmem_budget_bytes:
            continue
        best_tb = tb
    return best_tb, tn


def attention_forward(lstm_output, weight, bias):
    """Pallas implementation of Attention.forward.

    Args:
      lstm_output: (B, S, H) float32
      weight:      (H, H)    float32, nn.Linear weight (out_features, in_features)
      bias:        (H,)      float32, nn.Linear bias
    Returns:
      context:      (B, H)    float32
      attn_scores:  (B, S, H) float32
    """
    B, S, H = lstm_output.shape
    budget, limit = _vmem_config()
    tb, tn = _choose_tiles(B, S, H, budget)

    wt = weight.T.astype(jnp.bfloat16)            # (H, H): x @ W^T on the MXU
    b2 = bias.reshape(1, H).astype(jnp.float32)

    kernel = functools.partial(_attention_kernel, tb=tb, seq=S, tn=tn, h=H)

    ctx3, scores = pl.pallas_call(
        kernel,
        out_shape=(
            jax.ShapeDtypeStruct((B, 1, H), jnp.float32),
            jax.ShapeDtypeStruct((B, S, H), jnp.float32),
        ),
        grid_spec=pltpu.PrefetchScalarGridSpec(
            num_scalar_prefetch=0,
            grid=(B // tb, H // tn),
            in_specs=[
                # full-feature rows; index_map ignores j so the block stays
                # resident across the output-feature sweep (fetched once)
                pl.BlockSpec((tb, S, H), lambda i, j: (i, 0, 0)),
                # weight / bias feature tiles
                pl.BlockSpec((H, tn), lambda i, j: (0, j)),
                pl.BlockSpec((1, tn), lambda i, j: (0, j)),
            ],
            out_specs=[
                pl.BlockSpec((tb, 1, tn), lambda i, j: (i, 0, j)),   # context
                pl.BlockSpec((tb, S, tn), lambda i, j: (i, 0, j)),   # scores
            ],
            scratch_shapes=[pltpu.VMEM((tb, S, H), jnp.bfloat16)],
        ),
        compiler_params=pltpu.CompilerParams(
            # batch axis parallel (v7x dual-TC sharding), feature sweep
            # sequential so the resident x block + bf16 scratch are reused.
            dimension_semantics=("parallel", "arbitrary"),
            vmem_limit_bytes=limit,
        ),
    )(lstm_output, wt, b2)

    return ctx3.reshape(B, H), scores


def _reference(lstm_output, weight, bias):
    scores = jnp.einsum("bsh,oh->bso", lstm_output, weight) + bias
    p = jax.nn.softmax(scores, axis=1)
    ctx = jnp.sum(p * lstm_output, axis=1)
    return ctx, p


if __name__ == "__main__":
    key = jax.random.PRNGKey(0)
    B, S, H = 2, 8, 32
    kx, kw, kb = jax.random.split(key, 3)

    lstm_output = jax.random.normal(kx, (B, S, H), dtype=jnp.float32)
    # Deterministic nn.Linear-like init (uniform in [-1/sqrt(H), 1/sqrt(H)])
    bound = 1.0 / (H ** 0.5)
    weight = jax.random.uniform(kw, (H, H), jnp.float32, -bound, bound)
    bias = jax.random.uniform(kb, (H,), jnp.float32, -bound, bound)

    ctx, scores = attention_forward(lstm_output, weight, bias)
    jax.block_until_ready((ctx, scores))

    ref_ctx, ref_scores = _reference(lstm_output, weight, bias)
    # bf16 MXU inputs loosen the tolerance vs the f32 reference.
    assert jnp.allclose(ctx, ref_ctx, atol=2e-2, rtol=2e-2), "context mismatch"
    assert jnp.allclose(scores, ref_scores, atol=2e-2, rtol=2e-2), "scores mismatch"

    print("KERNEL_OK")
</pallas_src>

<mosaic_0001>
module attributes {stable_mosaic.version = 11 : i64} {
  func.func @_attention_kernel(%arg0: i32, %arg1: i32, %arg2: memref<1x8x32xf32, #tpu.memory_space<vmem>>, %arg3: memref<32x32xbf16, #tpu.memory_space<vmem>>, %arg4: memref<1x32xf32, #tpu.memory_space<vmem>>, %arg5: memref<1x1x32xf32, #tpu.memory_space<vmem>>, %arg6: memref<1x8x32xf32, #tpu.memory_space<vmem>>, %arg7: memref<1x8x32xbf16, #tpu.memory_space<vmem>>) attributes {dimension_semantics = [#tpu.dimension_semantics<parallel>, #tpu.dimension_semantics<arbitrary>], iteration_bounds = array<i64: 2, 1>, scalar_prefetch = 0 : i64, scratch_operands = 1 : i64, tpu.core_type = #tpu.core_type<tc>, window_params = [{transform_indices = @transform_0, window_bounds = array<i64: 1, 8, 32>}, {transform_indices = @transform_1, window_bounds = array<i64: 32, 32>}, {transform_indices = @transform_2, window_bounds = array<i64: 1, 32>}, {transform_indices = @transform_3, window_bounds = array<i64: 1, 1, 32>}, {transform_indices = @transform_4, window_bounds = array<i64: 1, 8, 32>}]} {
    %c0_i32 = arith.constant 0 : i32
    %0 = arith.cmpi eq, %arg1, %c0_i32 : i32
    %1 = arith.extui %0 : i1 to i32
    %c0_i32_0 = arith.constant 0 : i32
    %2 = arith.cmpi ne, %1, %c0_i32_0 : i32
    scf.if %2 {
      %c0_20 = arith.constant 0 : index
      %c0_21 = arith.constant 0 : index
      %c0_22 = arith.constant 0 : index
      %29 = vector.load %arg2[%c0_20, %c0_21, %c0_22] : memref<1x8x32xf32, #tpu.memory_space<vmem>>, vector<1x8x32xf32>
      %30 = arith.truncf %29 : vector<1x8x32xf32> to vector<1x8x32xbf16>
      %c0_23 = arith.constant 0 : index
      %c0_24 = arith.constant 0 : index
      %c0_25 = arith.constant 0 : index
      %31 = vector.load %arg7[%c0_23, %c0_24, %c0_25] : memref<1x8x32xbf16, #tpu.memory_space<vmem>>, vector<1x8x32xbf16>
      tpu.vector_store %arg7[%c0_23, %c0_24, %c0_25], %30 {strides = array<i32>} : memref<1x8x32xbf16, #tpu.memory_space<vmem>>, vector<1x8x32xbf16>,
    } else {
    }
    %c0 = arith.constant 0 : index
    %c0_1 = arith.constant 0 : index
    %c0_2 = arith.constant 0 : index
    %3 = vector.load %arg7[%c0, %c0_1, %c0_2] : memref<1x8x32xbf16, #tpu.memory_space<vmem>>, vector<1x8x32xbf16>
    %4 = vector.shape_cast %3 : vector<1x8x32xbf16> to vector<8x32xbf16>
    %c0_3 = arith.constant 0 : index
    %c0_4 = arith.constant 0 : index
    %5 = vector.load %arg3[%c0_3, %c0_4] : memref<32x32xbf16, #tpu.memory_space<vmem>>, vector<32x32xbf16>
    %cst = arith.constant dense<0.000000e+00> : vector<8x32xf32>
    %6 = tpu.matmul %4, %5, %cst {dimension_numbers = #tpu.dot_dimension_numbers<[1], [0], [0], [1], [0, 0, 1, 1], [], []>} : vector<8x32xbf16>, vector<32x32xbf16>, vector<8x32xf32> -> vector<8x32xf32>
    %7 = vector.shape_cast %6 : vector<8x32xf32> to vector<1x8x32xf32>
    %c0_5 = arith.constant 0 : index
    %c0_6 = arith.constant 0 : index
    %8 = vector.load %arg4[%c0_5, %c0_6] : memref<1x32xf32, #tpu.memory_space<vmem>>, vector<1x32xf32>
    %9 = vector.shape_cast %8 : vector<1x32xf32> to vector<1x1x32xf32>
    %10 = vector.broadcast %9 : vector<1x1x32xf32> to vector<1x8x32xf32>
    %11 = arith.addf %7, %10 : vector<1x8x32xf32>
    %cst_7 = arith.constant dense<0xFF800000> : vector<1x32xf32>
    %12 = vector.multi_reduction <maximumf>, %11, %cst_7 [1] : vector<1x8x32xf32> to vector<1x32xf32>
    %13 = vector.shape_cast %12 : vector<1x32xf32> to vector<1x1x32xf32>
    %14 = vector.broadcast %13 : vector<1x1x32xf32> to vector<1x8x32xf32>
    %15 = arith.subf %11, %14 : vector<1x8x32xf32>
    %16 = math.exp %15 : vector<1x8x32xf32>
    %cst_8 = arith.constant dense<0.000000e+00> : vector<1x32xf32>
    %17 = vector.multi_reduction <add>, %16, %cst_8 [1] : vector<1x8x32xf32> to vector<1x32xf32>
    %18 = vector.shape_cast %17 : vector<1x32xf32> to vector<1x1x32xf32>
    %cst_9 = arith.constant 1.000000e+00 : f32
    %19 = vector.broadcast %cst_9 : f32 to vector<1x1x32xf32>
    %20 = arith.divf %19, %18 : vector<1x1x32xf32>
    %21 = vector.broadcast %20 : vector<1x1x32xf32> to vector<1x8x32xf32>
    %22 = arith.mulf %16, %21 : vector<1x8x32xf32>
    %c0_10 = arith.constant 0 : index
    %c0_11 = arith.constant 0 : index
    %c0_12 = arith.constant 0 : index
    %23 = vector.load %arg2[%c0_10, %c0_11, %c0_12] : memref<1x8x32xf32, #tpu.memory_space<vmem>>, vector<1x8x32xf32>
    %24 = arith.mulf %22, %23 : vector<1x8x32xf32>
    %cst_13 = arith.constant dense<0.000000e+00> : vector<1x32xf32>
    %25 = vector.multi_reduction <add>, %24, %cst_13 [1] : vector<1x8x32xf32> to vector<1x32xf32>
    %26 = vector.shape_cast %25 : vector<1x32xf32> to vector<1x1x32xf32>
    %c0_14 = arith.constant 0 : index
    %c0_15 = arith.constant 0 : index
    %c0_16 = arith.constant 0 : index
    %27 = vector.load %arg5[%c0_14, %c0_15, %c0_16] : memref<1x1x32xf32, #tpu.memory_space<vmem>>, vector<1x1x32xf32>
    tpu.vector_store %arg5[%c0_14, %c0_15, %c0_16], %26 {strides = array<i32>} : memref<1x1x32xf32, #tpu.memory_space<vmem>>, vector<1x1x32xf32>,
    %c0_17 = arith.constant 0 : index
    %c0_18 = arith.constant 0 : index
    %c0_19 = arith.constant 0 : index
    %28 = vector.load %arg6[%c0_17, %c0_18, %c0_19] : memref<1x8x32xf32, #tpu.memory_space<vmem>>, vector<1x8x32xf32>
    tpu.vector_store %arg6[%c0_17, %c0_18, %c0_19], %22 {strides = array<i32>} : memref<1x8x32xf32, #tpu.memory_space<vmem>>, vector<1x8x32xf32>,
    return
  }
  func.func @transform_0(%arg0: i32, %arg1: i32) -> (i32, i32, i32) {
    %c0_i32 = arith.constant 0 : i32
    %c0_i32_0 = arith.constant 0 : i32
    %c0_i32_1 = arith.constant 0 : i32
    return %arg0, %c0_i32, %c0_i32_0 : i32, i32, i32
  }
  func.func @transform_1(%arg0: i32, %arg1: i32) -> (i32, i32) {
    %c0_i32 = arith.constant 0 : i32
    %c0_i32_0 = arith.constant 0 : i32
    return %c0_i32, %arg1 : i32, i32
  }
  func.func @transform_2(%arg0: i32, %arg1: i32) -> (i32, i32) {
    %c0_i32 = arith.constant 0 : i32
    %c0_i32_0 = arith.constant 0 : i32
    return %c0_i32, %arg1 : i32, i32
  }
  func.func @transform_3(%arg0: i32, %arg1: i32) -> (i32, i32, i32) {
    %c0_i32 = arith.constant 0 : i32
    %c0_i32_0 = arith.constant 0 : i32
    return %arg0, %c0_i32, %arg1 : i32, i32, i32
  }
  func.func @transform_4(%arg0: i32, %arg1: i32) -> (i32, i32, i32) {
    %c0_i32 = arith.constant 0 : i32
    %c0_i32_0 = arith.constant 0 : i32
    return %arg0, %c0_i32, %arg1 : i32, i32, i32
  }
}

</mosaic_0001>

<llo_original>
// kernel: tpu_custom_call.1
$region0: #{tpu_custom_call.1}
  #allocation0 [shape = 'u32[]', space=smem, size = 0x4, offset = 0x4, fixed_abs, tag = 'smem constant byte address 0x4 - core index']
  #allocation1 [shape = 'u32[144,128]{1,0:T(1,128)}', space=vmem, size = 0x12000, scoped, tag = 'internal scratch']
  #allocation2 [shape = 'bf16[1,8,32]{2,1,0:T(8,128)(2,1)}', space=vmem, size = 0x800, scoped, tag = 'scratch operand']
  %s0 = inlined_call_operand.hbm [shape: f32[2,8,32], index: 0, kind: input, shape index: {}]
  %s1 = inlined_call_operand.hbm [shape: bf16[32,32], index: 1, kind: input, shape index: {}]
  %s2 = inlined_call_operand.vmem [shape: f32[1,32], index: 2, kind: input, shape index: {}]
  %s3 = inlined_call_operand.hbm [shape: f32[2,1,32], index: 3, kind: output, shape index: {0}]
  %s4 = inlined_call_operand.hbm [shape: f32[2,8,32], index: 4, kind: output, shape index: {1}]
  %5 = xla_tuple %s3, %s4
  %s6 = sld [smem:[#allocation0]]
  $region65: #{tpu_custom_call.1} parent=0
    _
  %s8 = ssub.s32 1, %s6
  %s9 = scalar_select 0, %s8, %s6
  $region1: #{tpu_custom_call.1} parent=0
    #allocation3 [shape = 'u8[8192]{0}', space=vmem, size = 0x2000, scoped, tag = 'input window, operand 0']
    #allocation4 [shape = 's32[2]{0}', space=sflag, size = 0x8, scoped, tag = 'scoped memory for tpu_custom_call.1']
    #allocation5 [shape = 's32[2]{0}', space=sflag, size = 0x8, scoped, tag = 'scoped memory for tpu_custom_call.1']
    #allocation6 [shape = 'u8[8192]{0}', space=vmem, size = 0x2000, scoped, tag = 'input window, operand 1, single buffered']
    #allocation7 [shape = 's32[1]{0}', space=sflag, size = 0x4, scoped, tag = 'scoped memory for tpu_custom_call.1']
    #allocation8 [shape = 'u8[1024]{0}', space=vmem, size = 0x400, scoped, tag = 'output window, operand 0']
    #allocation9 [shape = 'u8[8192]{0}', space=vmem, size = 0x2000, scoped, tag = 'output window, operand 1']
    #allocation10 [shape = 's32[2]{0}', space=sflag, size = 0x8, scoped, tag = 'scoped memory for tpu_custom_call.1']
    %10 = vsyncpa [#allocation4], 0
    %s11 = scalar_lea.sflag [#allocation4], 1
    %12 = vsyncpa %s11, 0
    %13 = vsyncpa [#allocation7], 0
    %14 = vsyncpa [#allocation5], 0
    %s15 = scalar_lea.sflag [#allocation5], 1
    %16 = vsyncpa %s15, 0
    %17 = vsyncpa [#allocation10], 0
    %s18 = scalar_lea.sflag [#allocation10], 1
    %19 = vsyncpa %s18, 0
    loop: start=0, step=1, limit=4
    $region2: #{tpu_custom_call.1} parent=1 // loop_pre_header
      _
    $region3: #{tpu_custom_call.1} parent=1 // loop_header
      %s21 = sphi 0, %s25
      %p22 = scmp.ge.s32.totalorder %s21, 4
      %s28 = sphi 0, %s40
      %s29 = sphi 0, %s36
      %s30 = sphi 0, %s28
      %s31 = sphi 0, %s29
      %s32 = sphi 0, %s30
      %s33 = sphi 0, %s31
      %s43 = sphi 0, %s45
      %s46 = sphi 0, %s43
      %s47 = sphi 0, %s46
      %s63 = sphi 0, %s47
      %s69 = sphi 0, %s71
      %s72 = sphi 0, %s69
      %s73 = sphi 0, %s72
      %s89 = sphi 0, %s73
      %s95 = sphi 0, %s97
      %s98 = sphi 0, %s95
      %s99 = sphi 0, %s98
      %s115 = sphi 0, %s99
      %s123 = sphi 0, %s125
      %s126 = sphi 0, %s123
      %s127 = sphi 0, %s126
      %s143 = sphi 0, %s127
      %s151 = sphi 0, %s153
      %s154 = sphi 0, %s151
      %s155 = sphi 0, %s154
      %s171 = sphi 0, %s155
    $region4: #{tpu_custom_call.1} parent=1 // loop_header_branch
      %24 = sbr.rel (%p22) target = $region8
    $region5: #{tpu_custom_call.1} parent=1 // loop_body
      %s26 = ssub.s32 %s21, 1
      %s27 = ssub.s32 %s21, 2
      %s34 = sadd.s32 1, %s29
      %p35 = scmp.ge.s32.totalorder %s34, 1
      %s36 = scalar_select %p35, 0, %s34
      %s37 = sadd.s32 1, %s28
      %s38 = scalar_select %p35, %s37, %s28
      %p39 = scmp.ge.s32.totalorder %s38, 2
      %s40 = scalar_select %p39, 0, %s38
      %s41 = ssub.s32 %s28, %s40
      %p42 = scmp.eq.s32.totalorder %s41, 0
      %s44 = sadd.s32 %s43, 1
      %s45 = scalar_select %p42, %s43, %s44
      %p48 = pneg %p42
      %p49 = scmp.eq.s32.totalorder %s21, 1
      %p50 = por %p48, %p49
      %p51 = scmp.ne.s32.totalorder %s43, %s46
      %p52 = scmp.eq.s32.totalorder %s21, 0
      %p53 = por %p51, %p52
      %p54 = scmp.ne.s32.totalorder %s43, %s46
      %p55 = scmp.eq.s32.totalorder %s26, 1
      %p56 = por %p54, %p55
      %p57 = scmp.ne.s32.totalorder %s46, %s47
      %p58 = scmp.eq.s32.totalorder %s26, 0
      %p59 = por %p57, %p58
      %p60 = scmp.ne.s32.totalorder %s46, %s47
      %p61 = scmp.eq.s32.totalorder %s27, 1
      %p62 = por %p60, %p61
      %p64 = scmp.ne.s32.totalorder %s47, %s63
      %p65 = scmp.eq.s32.totalorder %s27, 0
      %p66 = por %p64, %p65
      %s67 = ssub.s32 %s29, %s36
      %p68 = scmp.eq.s32.totalorder %s67, 0
      %s70 = sadd.s32 %s69, 1
      %s71 = scalar_select %p68, %s69, %s70
      %p74 = pneg %p68
      %p75 = scmp.eq.s32.totalorder %s21, 1
      %p76 = por %p74, %p75
      %p77 = scmp.ne.s32.totalorder %s69, %s72
      %p78 = scmp.eq.s32.totalorder %s21, 0
      %p79 = por %p77, %p78
      %p80 = scmp.ne.s32.totalorder %s69, %s72
      %p81 = scmp.eq.s32.totalorder %s26, 1
      %p82 = por %p80, %p81
      %p83 = scmp.ne.s32.totalorder %s72, %s73
      %p84 = scmp.eq.s32.totalorder %s26, 0
      %p85 = por %p83, %p84
      %p86 = scmp.ne.s32.totalorder %s72, %s73
      %p87 = scmp.eq.s32.totalorder %s27, 1
      %p88 = por %p86, %p87
      %p90 = scmp.ne.s32.totalorder %s73, %s89
      %p91 = scmp.eq.s32.totalorder %s27, 0
      %p92 = por %p90, %p91
      %s93 = ssub.s32 %s29, %s36
      %p94 = scmp.eq.s32.totalorder %s93, 0
      %s96 = sadd.s32 %s95, 1
      %s97 = scalar_select %p94, %s95, %s96
      %p100 = pneg %p94
      %p101 = scmp.eq.s32.totalorder %s21, 1
      %p102 = por %p100, %p101
      %p103 = scmp.ne.s32.totalorder %s95, %s98
      %p104 = scmp.eq.s32.totalorder %s21, 0
      %p105 = por %p103, %p104
      %p106 = scmp.ne.s32.totalorder %s95, %s98
      %p107 = scmp.eq.s32.totalorder %s26, 1
      %p108 = por %p106, %p107
      %p109 = scmp.ne.s32.totalorder %s98, %s99
      %p110 = scmp.eq.s32.totalorder %s26, 0
      %p111 = por %p109, %p110
      %p112 = scmp.ne.s32.totalorder %s98, %s99
      %p113 = scmp.eq.s32.totalorder %s27, 1
      %p114 = por %p112, %p113
      %p116 = scmp.ne.s32.totalorder %s99, %s115
      %p117 = scmp.eq.s32.totalorder %s27, 0
      %p118 = por %p116, %p117
      %s119 = ssub.s32 %s28, %s40
      %s120 = ssub.s32 %s29, %s36
      %s121 = sor.u32 %s119, %s120
      %p122 = scmp.eq.s32.totalorder %s121, 0
      %s124 = sadd.s32 %s123, 1
      %s125 = scalar_select %p122, %s123, %s124
      %p128 = pneg %p122
      %p129 = scmp.eq.s32.totalorder %s21, 1
      %p130 = por %p128, %p129
      %p131 = scmp.ne.s32.totalorder %s123, %s126
      %p132 = scmp.eq.s32.totalorder %s21, 0
      %p133 = por %p131, %p132
      %p134 = scmp.ne.s32.totalorder %s123, %s126
      %p135 = scmp.eq.s32.totalorder %s26, 1
      %p136 = por %p134, %p135
      %p137 = scmp.ne.s32.totalorder %s126, %s127
      %p138 = scmp.eq.s32.totalorder %s26, 0
      %p139 = por %p137, %p138
      %p140 = scmp.ne.s32.totalorder %s126, %s127
      %p141 = scmp.eq.s32.totalorder %s27, 1
      %p142 = por %p140, %p141
      %p144 = scmp.ne.s32.totalorder %s127, %s143
      %p145 = scmp.eq.s32.totalorder %s27, 0
      %p146 = por %p144, %p145
      %s147 = ssub.s32 %s28, %s40
      %s148 = ssub.s32 %s29, %s36
      %s149 = sor.u32 %s147, %s148
      %p150 = scmp.eq.s32.totalorder %s149, 0
      %s152 = sadd.s32 %s151, 1
      %s153 = scalar_select %p150, %s151, %s152
      %p156 = pneg %p150
      %p157 = scmp.eq.s32.totalorder %s21, 1
      %p158 = por %p156, %p157
      %p159 = scmp.ne.s32.totalorder %s151, %s154
      %p160 = scmp.eq.s32.totalorder %s21, 0
      %p161 = por %p159, %p160
      %p162 = scmp.ne.s32.totalorder %s151, %s154
      %p163 = scmp.eq.s32.totalorder %s26, 1
      %p164 = por %p162, %p163
      %p165 = scmp.ne.s32.totalorder %s154, %s155
      %p166 = scmp.eq.s32.totalorder %s26, 0
      %p167 = por %p165, %p166
      %p168 = scmp.ne.s32.totalorder %s154, %s155
      %p169 = scmp.eq.s32.totalorder %s27, 1
      %p170 = por %p168, %p169
      %p172 = scmp.ne.s32.totalorder %s155, %s171
      %p173 = scmp.eq.s32.totalorder %s27, 0
      %p174 = por %p172, %p173
      %p175 = scmp.le.s32.totalorder 1, %s21
      %p176 = scmp.lt.s32.totalorder %s21, 3
      %p177 = pnand %p175, %p176
      %p178 = pneg %p177
      // Predicated region
      $region9: #{tpu_custom_call.1} parent=5 // pred_check
        _
      $region10: #{tpu_custom_call.1} parent=5 // pred_check_branch
        %180 = sbr.rel (%p177) target = $region12
      $region11: #{tpu_custom_call.1} parent=5 // pred_region
        %s181 = ssub.s32 %s21, 1
        // Predicated region
        $region13: #{tpu_custom_call.1} parent=11 // pred_check
          %p182 = pneg %p85
        $region14: #{tpu_custom_call.1} parent=11 // pred_check_branch
          %184 = sbr.rel (%p182) target = $region16
        $region15: #{tpu_custom_call.1} parent=11 // pred_region
          %s186 = ssub.s32 256, 256
          %187 = vsyncadd [#allocation7], %s186
          %s188 = smul.addr %s31, 64
          %s189 = scalar_lea.hbm %s1, %s188
          %s190 = sshll.u32 [#allocation6], 4
          %s191 = int_to_ptr.vmem [resolvable:$true] %s190
          %196 = dma.hbm_to_vmem [thread:$0]  %s189, 256, %s191, [#allocation7], 64, 64, 4
        $region16: #{tpu_custom_call.1} parent=11 // pred_fallthru
          _
        // Predicated region
        $region17: #{tpu_custom_call.1} parent=11 // pred_check
          %p197 = pneg %p111
        $region18: #{tpu_custom_call.1} parent=11 // pred_check_branch
          %199 = sbr.rel (%p197) target = $region20
        $region19: #{tpu_custom_call.1} parent=11 // pred_region
          %p200 = scmp.lt.s32.totalorder %s31, 0
          %s201 = scalar_select %p200, %s31, 0
          %s202 = scalar_lea.vmem %s2, %s201
        $region20: #{tpu_custom_call.1} parent=11 // pred_fallthru
          _
      $region12: #{tpu_custom_call.1} parent=5 // pred_fallthru
        _
      %p203 = scmp.lt.s32.totalorder %s21, 2
      // Predicated region
      $region21: #{tpu_custom_call.1} parent=5 // pred_check
        %p204 = pneg %p203
      $region22: #{tpu_custom_call.1} parent=5 // pred_check_branch
        %206 = sbr.rel (%p204) target = $region24
      $region23: #{tpu_custom_call.1} parent=5 // pred_region
        // Predicated region
        $region25: #{tpu_custom_call.1} parent=23 // pred_check
          %p207 = pneg %p53
        $region26: #{tpu_custom_call.1} parent=23 // pred_check_branch
          %209 = sbr.rel (%p207) target = $region28
        $region27: #{tpu_custom_call.1} parent=23 // pred_region
          %s210 = sand.u32 %s43, 1
          %s211 = scalar_lea.sflag [#allocation4], %s210
          %s212 = sand.u32 %s43, 1
          %s213 = smul.addr %s212, 8
          %s214 = scalar_lea.vmem [#allocation3], %s213
          %s216 = ssub.s32 128, 128
          %217 = vsyncadd %s211, %s216
          %s218 = smul.addr %s28, 128
          %s219 = scalar_lea.hbm %s0, %s218
          %s221 = sshll.u32 %s214, 4
          %s222 = int_to_ptr.vmem [resolvable:$true] %s221
          %224 = dma.hbm_to_vmem [thread:$0]  %s219, 128, %s222, %s211
        $region28: #{tpu_custom_call.1} parent=23 // pred_fallthru
          _
      $region24: #{tpu_custom_call.1} parent=5 // pred_fallthru
        _
      %p225 = scmp.le.s32.totalorder 1, %s21
      %p226 = scmp.lt.s32.totalorder %s21, 3
      %p227 = pnand %p225, %p226
      %p228 = pneg %p227
      // Predicated region
      $region29: #{tpu_custom_call.1} parent=5 // pred_check
        _
      $region30: #{tpu_custom_call.1} parent=5 // pred_check_branch
        %230 = sbr.rel (%p227) target = $region32
      $region31: #{tpu_custom_call.1} parent=5 // pred_region
        %s231 = ssub.s32 %s21, 1
        %s232 = sand.u32 %s46, 1
        %s233 = scalar_lea.sflag [#allocation4], %s232
        %s234 = sand.u32 %s46, 1
        %s235 = smul.addr %s234, 8
        %s236 = scalar_lea.vmem [#allocation3], %s235
        // Predicated region
        $region33: #{tpu_custom_call.1} parent=31 // pred_check
          %p237 = pneg %p59
        $region34: #{tpu_custom_call.1} parent=31 // pred_check_branch
          %239 = sbr.rel (%p237) target = $region36
        $region35: #{tpu_custom_call.1} parent=31 // pred_region
          %240 = dma.done %s233, 128
        $region36: #{tpu_custom_call.1} parent=31 // pred_fallthru
          _
        // Predicated region
        $region37: #{tpu_custom_call.1} parent=31 // pred_check
          %p241 = pneg %p85
        $region38: #{tpu_custom_call.1} parent=31 // pred_check_branch
          %243 = sbr.rel (%p241) target = $region40
        $region39: #{tpu_custom_call.1} parent=31 // pred_region
          %244 = dma.done [#allocation7], 256
        $region40: #{tpu_custom_call.1} parent=31 // pred_fallthru
          _
        %s245 = sand.u32 %s46, 1
        %s246 = scalar_lea.sflag [#allocation4], %s245
        %s247 = sand.u32 %s46, 1
        %s248 = smul.addr %s247, 8
        %s249 = scalar_lea.vmem [#allocation3], %s248
        %p250 = pneg %p59
        %p251 = pneg %p56
        %p252 = pneg %p85
        %p253 = pneg %p82
        %p254 = scmp.lt.s32.totalorder %s31, 0
        %s255 = scalar_select %p254, %s31, 0
        %s256 = scalar_lea.vmem %s2, %s255
        %p257 = pneg %p111
        %p258 = pneg %p108
        %p259 = pneg %p139
        %p260 = pneg %p136
        %s261 = sand.u32 %s126, 1
        %s262 = scalar_lea.sflag [#allocation5], %s261
        %s263 = sand.u32 %s126, 1
        %s264 = scalar_lea.vmem [#allocation8], %s263
        %p265 = pneg %p167
        %p266 = pneg %p164
        %s267 = sand.u32 %s154, 1
        %s268 = scalar_lea.sflag [#allocation10], %s267
        %s269 = sand.u32 %s154, 1
        %s270 = smul.addr %s269, 8
        %s271 = scalar_lea.vmem [#allocation9], %s270
        %p272 = scmp.lt.s32.totalorder %s31, 0
        %s273 = scalar_select %p272, %s31, 0
        %s274 = scalar_lea.vmem %s2, %s273
        %p276 = scmp.eq.s32.totalorder %s31, 0
        // Predicated region
        $region41: #{tpu_custom_call.1} parent=31 // pred_check
          %p277 = pneg %p276
        $region42: #{tpu_custom_call.1} parent=31 // pred_check_branch
          %279 = sbr.rel (%p277) target = $region44
        $region43: #{tpu_custom_call.1} parent=31 // pred_region
          %v280 = vld [vmem:[%s236] sm:$0xff]
          %v281 = vpack.c.bf16 %v280, %v280
          %vm282 = vcmask 257024
          %283 = vst.msk [vmem:[#allocation2] sm:$0xf] %vm282, %v281
        $region44: #{tpu_custom_call.1} parent=31 // pred_fallthru
          _
        %v284 = vld [vmem:[#allocation2] sm:$0xf]
        %v285 = vld [vmem:[#allocation6] sm:$0xf]
        %v286 = vld [vmem:[#allocation6 + $0x4] sm:$0xf]
        %v287 = vld [vmem:[#allocation6 + $0x8] sm:$0xf]
        %v288 = vld [vmem:[#allocation6 + $0xc] sm:$0xf]
        %v293 = vunpack.c.l.b16 %v285
        %v294 = vunpack.c.l.b16 %v286
        %v295 = vunpack.c.l.b16 %v287
        %v296 = vunpack.c.l.b16 %v288
        %v297 = vpack.c.b16 %v294, %v293
        %v298 = vpack.c.b16 %v296, %v295
        %vm301 = vcmask 261120
        %v303 = vsel %vm301, %v284, 0
        %305 = vmatprep.subr.bf16.mxu0 0
        %306 = vmatpush1.bf16.msra.mxu0 %v297
        %307 = vmatprep.subr.bf16.mxu0 0
        %308 = vmatpush1.bf16.msra.mxu0 %v298
        %309 = vmatprep.subr.bf16.mxu0 0
        %310 = vmatpush1.bf16.msra.mxu0 0
        %311 = vmatprep.subr.bf16.mxu0 0
        %312 = vmatpush1.bf16.msra.mxu0 0
        %313 = vmatprep.subr.bf16.mxu0 0
        %314 = vmatpush1.bf16.msra.mxu0 0
        %315 = vmatprep.subr.bf16.mxu0 0
        %316 = vmatpush1.bf16.msra.mxu0 0
        %317 = vmatprep.subr.bf16.mxu0 0
        %318 = vmatpush1.bf16.msra.mxu0 0
        %319 = vmatprep.subr.bf16.mxu0 0
        %320 = vmatpush1.bf16.msra.mxu0 0
        %321 = vmatprep.subr.bf16.mxu0 0
        %322 = vmatpush1.bf16.msra.mxu0 0
        %323 = vmatprep.subr.bf16.mxu0 0
        %324 = vmatpush1.bf16.msra.mxu0 0
        %325 = vmatprep.subr.bf16.mxu0 0
        %326 = vmatpush1.bf16.msra.mxu0 0
        %327 = vmatprep.subr.bf16.mxu0 0
        %328 = vmatpush1.bf16.msra.mxu0 0
        %329 = vmatprep.subr.bf16.mxu0 0
        %330 = vmatpush1.bf16.msra.mxu0 0
        %331 = vmatprep.subr.bf16.mxu0 0
        %332 = vmatpush1.bf16.msra.mxu0 0
        %333 = vmatprep.subr.bf16.mxu0 0
        %334 = vmatpush1.bf16.msra.mxu0 0
        %335 = vmatprep.subr.bf16.mxu0 0
        %336 = vmatpush1.bf16.msra.mxu0 0
        %337 = vmatprep.mubr.bf16.mxu0 0
        %338 = vmatmul.mubr.bf16.gmra.mrb[0].mxu0 %v303
        %v339 = vpop.f32.mrb[0].mxu0
        %v340 = vadd.f32 0.0, %v339
        %v341 = vpop.f32.mrb[0].mxu0
        %v342 = vpop.f32.mrb[0].mxu0
        %v343 = vpop.f32.mrb[0].mxu0
        %344 = vdwg.mxu0
        %v345 = vld [vmem:[%s274] sm:$0x1]
        %v347 = vlaneseq
        %v348 = vshrl.u32 %v347, 7
        %v349 = vsub.s32 0, %v348
        %v350 = vrot.slane %v345, %v349
        %v352 = vadd.f32 %v340, %v350
        %v353 = vsel %vm301, %v352, -inf
        %v354 = vrot.slane %v353, 4
        %v355 = vmax.f32 %v353, %v354
        %v356 = vrot.slane %v355, 2
        %v357 = vmax.f32 %v355, %v356
        %v358 = vrot.slane %v357, 1
        %v359 = vmax.f32 %v357, %v358
        %v360 = vsub.f32 %v352, %v359
        %v361 = vmul.f32 %v360, 1.442695
        %v362 = vpow.pop %v361
        %v363 = vsel %vm301, %v362, 0.0
        %v364 = vrot.slane %v363, 4
        %v365 = vadd.f32 %v363, %v364
        %v366 = vrot.slane %v365, 2
        %v367 = vadd.f32 %v365, %v366
        %v368 = vrot.slane %v367, 1
        %v369 = vadd.f32 %v367, %v368
        %v370 = vrcp.pop %v369
        %v371 = vmul.f32 1.0, %v370
        %v372 = vmul.f32 %v362, %v371
        %v373 = vld [vmem:[%s236] sm:$0xff]
        %v374 = vmul.f32 %v372, %v373
        %v375 = vsel %vm301, %v374, 0.0
        %v376 = vrot.slane %v375, 4
        %v377 = vadd.f32 %v375, %v376
        %v378 = vrot.slane %v377, 2
        %v379 = vadd.f32 %v377, %v378
        %v380 = vrot.slane %v379, 1
        %v381 = vadd.f32 %v379, %v380
        %vm382 = vcmask 253952
        %383 = vst.msk [vmem:[%s264] sm:$0x1] %vm382, %v381
        %384 = vst.msk [vmem:[%s271] sm:$0xff] %vm301, %v372
        %s385 = sand.u32 %s126, 1
        %s386 = scalar_lea.sflag [#allocation5], %s385
        %s387 = sand.u32 %s126, 1
        %s388 = scalar_lea.vmem [#allocation8], %s387
        %s389 = sand.u32 %s154, 1
        %s390 = scalar_lea.sflag [#allocation10], %s389
        %s391 = sand.u32 %s154, 1
        %s392 = smul.addr %s391, 8
        %s393 = scalar_lea.vmem [#allocation9], %s392
        // Predicated region
        $region45: #{tpu_custom_call.1} parent=31 // pred_check
          %p394 = pneg %p136
        $region46: #{tpu_custom_call.1} parent=31 // pred_check_branch
          %396 = sbr.rel (%p394) target = $region48
        $region47: #{tpu_custom_call.1} parent=31 // pred_region
          %s398 = ssub.s32 16, 16
          %399 = vsyncadd %s386, %s398
          %s400 = sadd.s32 %s31, %s30
          %s401 = smul.addr %s400, 16
          %s402 = scalar_lea.hbm %s3, %s401
          %s404 = sshll.u32 %s388, 4
          %s405 = int_to_ptr.vmem [resolvable:$true] %s404
          %407 = dma.vmem_to_hbm [thread:$0]  %s405, 16, %s402, %s386
        $region48: #{tpu_custom_call.1} parent=31 // pred_fallthru
          _
        // Predicated region
        $region49: #{tpu_custom_call.1} parent=31 // pred_check
          %p408 = pneg %p164
        $region50: #{tpu_custom_call.1} parent=31 // pred_check_branch
          %410 = sbr.rel (%p408) target = $region52
        $region51: #{tpu_custom_call.1} parent=31 // pred_region
          %s412 = ssub.s32 128, 128
          %413 = vsyncadd %s390, %s412
          %s414 = sadd.s32 %s31, %s30
          %s415 = smul.addr %s414, 128
          %s416 = scalar_lea.hbm %s4, %s415
          %s418 = sshll.u32 %s393, 4
          %s419 = int_to_ptr.vmem [resolvable:$true] %s418
          %421 = dma.vmem_to_hbm [thread:$0]  %s419, 128, %s416, %s390
        $region52: #{tpu_custom_call.1} parent=31 // pred_fallthru
          _
      $region32: #{tpu_custom_call.1} parent=5 // pred_fallthru
        _
      %p422 = scmp.le.s32.totalorder 2, %s21
      // Predicated region
      $region53: #{tpu_custom_call.1} parent=5 // pred_check
        %p423 = pneg %p422
      $region54: #{tpu_custom_call.1} parent=5 // pred_check_branch
        %425 = sbr.rel (%p423) target = $region56
      $region55: #{tpu_custom_call.1} parent=5 // pred_region
        %s426 = ssub.s32 %s21, 2
        // Predicated region
        $region57: #{tpu_custom_call.1} parent=55 // pred_check
          %p427 = pneg %p142
        $region58: #{tpu_custom_call.1} parent=55 // pred_check_branch
          %429 = sbr.rel (%p427) target = $region60
        $region59: #{tpu_custom_call.1} parent=55 // pred_region
          %s430 = sand.u32 %s127, 1
          %s431 = scalar_lea.sflag [#allocation5], %s430
          %s432 = sand.u32 %s127, 1
          %s433 = scalar_lea.vmem [#allocation8], %s432
          %434 = dma.done %s431, 16
        $region60: #{tpu_custom_call.1} parent=55 // pred_fallthru
          _
        // Predicated region
        $region61: #{tpu_custom_call.1} parent=55 // pred_check
          %p435 = pneg %p170
        $region62: #{tpu_custom_call.1} parent=55 // pred_check_branch
          %437 = sbr.rel (%p435) target = $region64
        $region63: #{tpu_custom_call.1} parent=55 // pred_region
          %s438 = sand.u32 %s155, 1
          %s439 = scalar_lea.sflag [#allocation10], %s438
          %s440 = sand.u32 %s155, 1
          %s441 = smul.addr %s440, 8
          %s442 = scalar_lea.vmem [#allocation9], %s441
          %443 = dma.done %s439, 128
        $region64: #{tpu_custom_call.1} parent=55 // pred_fallthru
          _
      $region56: #{tpu_custom_call.1} parent=5 // pred_fallthru
        _
    $region6: #{tpu_custom_call.1} parent=1 // loop_footer
      %s25 = sadd.s32 1, %s21
    $region7: #{tpu_custom_call.1} parent=1 // loop_footer_branch
      %20 = sbr.rel target = $region3
    $region8: #{tpu_custom_call.1} parent=1 // loop_exit
      _
    %444 = vsyncpa [#allocation4], 1
    %s445 = scalar_lea.sflag [#allocation4], 1
    %446 = vsyncpa %s445, 1
    %447 = vsyncpa [#allocation7], 1
    %448 = vsyncpa [#allocation5], 1
    %s449 = scalar_lea.sflag [#allocation5], 1
    %450 = vsyncpa %s449, 1
    %451 = vsyncpa [#allocation10], 1
    %s452 = scalar_lea.sflag [#allocation10], 1
    %453 = vsyncpa %s452, 1

</llo_original>
